<compile_context>
chip_gen: v7x
topology: tpu7x:2x2x1
jax: 0.10.0
libtpu: 0.0.40
codegen_flags: <defaults>
</compile_context>

<pallas_src>
import functools

import jax
import jax.numpy as jnp
from jax.experimental import pallas as pl
from jax.experimental.pallas import tpu as pltpu


def _round_up(n, m):
    return ((n + m - 1) // m) * m


def ae_kernel(x_ref, w1_ref, b1_ref, w2_ref, b2_ref, o_ref):
    # Hidden layer: sigmoid(x @ W1 + b1). Matmul -> MXU (f32 accumulate),
    # bias add -> VPU, sigmoid -> EUP.
    h = jnp.dot(x_ref[...], w1_ref[...], preferred_element_type=jnp.float32)
    h = jax.nn.sigmoid(h + b1_ref[...].astype(jnp.float32))
    # Output layer: h @ W2 + b2 (no activation, matching the PyTorch forward).
    # astype is a no-op for f32 weights; for bf16 weights it keeps the second
    # matmul on the bf16 MXU path (accumulation stays f32).
    out = jnp.dot(h.astype(w2_ref.dtype), w2_ref[...],
                  preferred_element_type=jnp.float32)
    out = out + b2_ref[...].astype(jnp.float32)
    o_ref[...] = out.astype(o_ref.dtype)


def _weight_spec(shape, single_buffer):
    if single_buffer:
        # Constant index_map -> block is VMEM-resident across the whole grid;
        # single-buffering avoids paying 2x VMEM for it (matters on v7x's
        # 64 MiB VMEM once the model grows).
        return pl.BlockSpec(shape, lambda i: (0, 0), pipeline_mode=pl.Buffered(1))
    return pl.BlockSpec(shape, lambda i: (0, 0))


@functools.partial(jax.jit, static_argnames=("block_b", "single_buffer_weights"))
def _ae_forward(x, w1, b1, w2, b2, block_b, single_buffer_weights):
    B, D_in = x.shape
    D_H = w1.shape[1]
    D_out = w2.shape[1]

    b1 = b1.reshape(1, D_H)
    b2 = b2.reshape(1, D_out)

    # --- Batch tiling: no pad/slice, balanced tiles --------------------------
    n_tiles = max(1, pl.cdiv(B, block_b))
    TB = _round_up(pl.cdiv(B, n_tiles), 8)   # multiple of 8 sublanes, balanced
    grid = (pl.cdiv(B, TB),)                 # partial last block masked by Pallas

    # --- VMEM budget & cost hint ---------------------------------------------
    x_isz = jnp.dtype(x.dtype).itemsize
    w_isz = jnp.dtype(w1.dtype).itemsize
    weight_bytes = (D_in * D_H + D_H + D_H * D_out + D_out) * w_isz
    stream_bytes = 2 * TB * (D_in + D_out) * x_isz   # double-buffered x/out tiles
    w_bufs = 1 if single_buffer_weights else 2
    needed = w_bufs * weight_bytes + stream_bytes
    vmem_limit = int(min(max(2 * needed + (4 << 20), 32 << 20), 128 << 20))

    cost = pl.CostEstimate(
        flops=2 * B * (D_in * D_H + D_H * D_out),
        transcendentals=B * D_H,  # sigmoid
        bytes_accessed=B * (D_in + D_out) * x_isz + weight_bytes,
    )

    return pl.pallas_call(
        ae_kernel,
        out_shape=jax.ShapeDtypeStruct((B, D_out), x.dtype),
        grid_spec=pl.GridSpec(
            grid=grid,
            in_specs=[
                pl.BlockSpec((TB, D_in), lambda i: (i, 0)),         # x: streamed over batch
                _weight_spec((D_in, D_H), single_buffer_weights),   # W1: VMEM-resident
                _weight_spec((1, D_H), single_buffer_weights),      # b1
                _weight_spec((D_H, D_out), single_buffer_weights),  # W2
                _weight_spec((1, D_out), single_buffer_weights),    # b2
            ],
            out_specs=pl.BlockSpec((TB, D_out), lambda i: (i, 0)),
        ),
        compiler_params=pltpu.CompilerParams(
            dimension_semantics=("parallel",),   # batch tiles across TCs (v7x)
            vmem_limit_bytes=vmem_limit,
        ),
        cost_estimate=cost,
    )(x, w1, b1, w2, b2)


def ae_forward(x, w1, b1, w2, b2, block_b=1024):
    """forward(x) = sigmoid(x @ w1 + b1) @ w2 + b2.

    x: [B, D_in]; w1: [D_in, D_H] (pre-transposed vs nn.Linear); b1: [D_H] or
    [1, D_H]; w2: [D_H, D_out]; b2: [D_out] or [1, D_out].
    Pass bf16 x / weights to halve HBM traffic; accumulation stays f32.
    """
    try:
        return _ae_forward(x, w1, b1, w2, b2, block_b, True)
    except Exception:
        # Fallback for jax builds without BlockSpec(pipeline_mode=pl.Buffered(1)):
        # default double-buffered weights (extra VMEM only, identical results).
        return _ae_forward(x, w1, b1, w2, b2, block_b, False)


def init_params(key, D_in, D_H, D_out, dtype=jnp.float32):
    # Deterministic init mimicking nn.Linear's uniform(-1/sqrt(fan_in), 1/sqrt(fan_in)).
    k1, k2, k3, k4 = jax.random.split(key, 4)
    bound1 = 1.0 / jnp.sqrt(D_in)
    bound2 = 1.0 / jnp.sqrt(D_H)
    # Stored already transposed: [in, out] so the kernel does x @ W.
    w1 = jax.random.uniform(k1, (D_in, D_H), dtype, -bound1, bound1)
    b1 = jax.random.uniform(k2, (1, D_H), dtype, -bound1, bound1)
    w2 = jax.random.uniform(k3, (D_H, D_out), dtype, -bound2, bound2)
    b2 = jax.random.uniform(k4, (1, D_out), dtype, -bound2, bound2)
    return w1, b1, w2, b2


if __name__ == "__main__":
    # Autoencoder on flat binary data: D_out == D_in.
    B, D_in, D_H, D_out = 8, 64, 32, 64

    key = jax.random.PRNGKey(0)
    kx, kp = jax.random.split(key)
    # Binary input data (matches "binary data" autoencoder), kept float32.
    x = (jax.random.uniform(kx, (B, D_in)) > 0.5).astype(jnp.float32)
    w1, b1, w2, b2 = init_params(kp, D_in, D_H, D_out)

    out = ae_forward(x, w1, b1, w2, b2)
    out = jax.block_until_ready(out)

    # Reference check in plain JAX (same math as the PyTorch forward).
    ref = jax.nn.sigmoid(x @ w1 + b1) @ w2 + b2
    assert out.shape == (B, D_out)
    assert jnp.allclose(out, ref, atol=1e-5, rtol=1e-5), \
        float(jnp.max(jnp.abs(out - ref)))

    print("KERNEL_OK")
</pallas_src>

<mosaic_0001>
module attributes {stable_mosaic.version = 11 : i64} {
  func.func @ae_kernel(%arg0: i32, %arg1: memref<8x64xf32, #tpu.memory_space<vmem>>, %arg2: memref<64x32xf32, #tpu.memory_space<vmem>>, %arg3: memref<1x32xf32, #tpu.memory_space<vmem>>, %arg4: memref<32x64xf32, #tpu.memory_space<vmem>>, %arg5: memref<1x64xf32, #tpu.memory_space<vmem>>, %arg6: memref<8x64xf32, #tpu.memory_space<vmem>>) attributes {dimension_semantics = [#tpu.dimension_semantics<parallel>], iteration_bounds = array<i64: 1>, scalar_prefetch = 0 : i64, scratch_operands = 0 : i64, tpu.core_type = #tpu.core_type<tc>, window_params = [{transform_indices = @transform_0, window_bounds = array<i64: 8, 64>}, {pipeline_mode = #tpu.pipeline_mode<synchronous>, transform_indices = @transform_1, window_bounds = array<i64: 64, 32>}, {pipeline_mode = #tpu.pipeline_mode<synchronous>, transform_indices = @transform_2, window_bounds = array<i64: 1, 32>}, {pipeline_mode = #tpu.pipeline_mode<synchronous>, transform_indices = @transform_3, window_bounds = array<i64: 32, 64>}, {pipeline_mode = #tpu.pipeline_mode<synchronous>, transform_indices = @transform_4, window_bounds = array<i64: 1, 64>}, {transform_indices = @transform_5, window_bounds = array<i64: 8, 64>}]} {
    %c0 = arith.constant 0 : index
    %c0_0 = arith.constant 0 : index
    %0 = vector.load %arg1[%c0, %c0_0] : memref<8x64xf32, #tpu.memory_space<vmem>>, vector<8x64xf32>
    %c0_1 = arith.constant 0 : index
    %c0_2 = arith.constant 0 : index
    %1 = vector.load %arg2[%c0_1, %c0_2] : memref<64x32xf32, #tpu.memory_space<vmem>>, vector<64x32xf32>
    %cst = arith.constant dense<0.000000e+00> : vector<8x32xf32>
    %2 = tpu.matmul %0, %1, %cst {dimension_numbers = #tpu.dot_dimension_numbers<[1], [0], [0], [1], [0, 0, 1, 1], [], []>} : vector<8x64xf32>, vector<64x32xf32>, vector<8x32xf32> -> vector<8x32xf32>
    %c0_3 = arith.constant 0 : index
    %c0_4 = arith.constant 0 : index
    %3 = vector.load %arg3[%c0_3, %c0_4] : memref<1x32xf32, #tpu.memory_space<vmem>>, vector<1x32xf32>
    %4 = vector.broadcast %3 : vector<1x32xf32> to vector<8x32xf32>
    %5 = arith.addf %2, %4 : vector<8x32xf32>
    %6 = arith.negf %5 : vector<8x32xf32>
    %7 = math.exp %6 : vector<8x32xf32>
    %cst_5 = arith.constant 1.000000e+00 : f32
    %8 = vector.broadcast %cst_5 : f32 to vector<8x32xf32>
    %9 = arith.addf %8, %7 : vector<8x32xf32>
    %10 = arith.divf %8, %9 : vector<8x32xf32>
    %c0_6 = arith.constant 0 : index
    %c0_7 = arith.constant 0 : index
    %11 = vector.load %arg4[%c0_6, %c0_7] : memref<32x64xf32, #tpu.memory_space<vmem>>, vector<32x64xf32>
    %cst_8 = arith.constant dense<0.000000e+00> : vector<8x64xf32>
    %12 = tpu.matmul %10, %11, %cst_8 {dimension_numbers = #tpu.dot_dimension_numbers<[1], [0], [0], [1], [0, 0, 1, 1], [], []>} : vector<8x32xf32>, vector<32x64xf32>, vector<8x64xf32> -> vector<8x64xf32>
    %c0_9 = arith.constant 0 : index
    %c0_10 = arith.constant 0 : index
    %13 = vector.load %arg5[%c0_9, %c0_10] : memref<1x64xf32, #tpu.memory_space<vmem>>, vector<1x64xf32>
    %14 = vector.broadcast %13 : vector<1x64xf32> to vector<8x64xf32>
    %15 = arith.addf %12, %14 : vector<8x64xf32>
    %c0_11 = arith.constant 0 : index
    %c0_12 = arith.constant 0 : index
    %16 = vector.load %arg6[%c0_11, %c0_12] : memref<8x64xf32, #tpu.memory_space<vmem>>, vector<8x64xf32>
    tpu.vector_store %arg6[%c0_11, %c0_12], %15 {strides = array<i32>} : memref<8x64xf32, #tpu.memory_space<vmem>>, vector<8x64xf32>,
    return
  }
  func.func @transform_0(%arg0: i32) -> (i32, i32) {
    %c0_i32 = arith.constant 0 : i32
    %c0_i32_0 = arith.constant 0 : i32
    return %arg0, %c0_i32 : i32, i32
  }
  func.func @transform_1(%arg0: i32) -> (i32, i32) {
    %c0_i32 = arith.constant 0 : i32
    %c0_i32_0 = arith.constant 0 : i32
    %c0_i32_1 = arith.constant 0 : i32
    return %c0_i32, %c0_i32_0 : i32, i32
  }
  func.func @transform_2(%arg0: i32) -> (i32, i32) {
    %c0_i32 = arith.constant 0 : i32
    %c0_i32_0 = arith.constant 0 : i32
    %c0_i32_1 = arith.constant 0 : i32
    return %c0_i32, %c0_i32_0 : i32, i32
  }
  func.func @transform_3(%arg0: i32) -> (i32, i32) {
    %c0_i32 = arith.constant 0 : i32
    %c0_i32_0 = arith.constant 0 : i32
    %c0_i32_1 = arith.constant 0 : i32
    return %c0_i32, %c0_i32_0 : i32, i32
  }
  func.func @transform_4(%arg0: i32) -> (i32, i32) {
    %c0_i32 = arith.constant 0 : i32
    %c0_i32_0 = arith.constant 0 : i32
    %c0_i32_1 = arith.constant 0 : i32
    return %c0_i32, %c0_i32_0 : i32, i32
  }
  func.func @transform_5(%arg0: i32) -> (i32, i32) {
    %c0_i32 = arith.constant 0 : i32
    %c0_i32_0 = arith.constant 0 : i32
    return %arg0, %c0_i32 : i32, i32
  }
}

module attributes {stable_mosaic.version = 11 : i64} {
  func.func @ae_kernel(%arg0: i32, %arg1: memref<8x64xf32, #tpu.memory_space<vmem>>, %arg2: memref<64x32xf32, #tpu.memory_space<vmem>>, %arg3: memref<1x32xf32, #tpu.memory_space<vmem>>, %arg4: memref<32x64xf32, #tpu.memory_space<vmem>>, %arg5: memref<1x64xf32, #tpu.memory_space<vmem>>, %arg6: memref<8x64xf32, #tpu.memory_space<vmem>>) attributes {dimension_semantics = [#tpu.dimension_semantics<parallel>], iteration_bounds = array<i64: 1>, scalar_prefetch = 0 : i64, scratch_operands = 0 : i64, tpu.core_type = #tpu.core_type<tc>, window_params = [{transform_indices = @transform_0, window_bounds = array<i64: 8, 64>}, {pipeline_mode = #tpu.pipeline_mode<synchronous>, transform_indices = @transform_1, window_bounds = array<i64: 64, 32>}, {pipeline_mode = #tpu.pipeline_mode<synchronous>, transform_indices = @transform_2, window_bounds = array<i64: 1, 32>}, {pipeline_mode = #tpu.pipeline_mode<synchronous>, transform_indices = @transform_3, window_bounds = array<i64: 32, 64>}, {pipeline_mode = #tpu.pipeline_mode<synchronous>, transform_indices = @transform_4, window_bounds = array<i64: 1, 64>}, {transform_indices = @transform_5, window_bounds = array<i64: 8, 64>}]} {
    %c0 = arith.constant 0 : index
    %c0_0 = arith.constant 0 : index
    %0 = vector.load %arg1[%c0, %c0_0] : memref<8x64xf32, #tpu.memory_space<vmem>>, vector<8x64xf32>
    %c0_1 = arith.constant 0 : index
    %c0_2 = arith.constant 0 : index
    %1 = vector.load %arg2[%c0_1, %c0_2] : memref<64x32xf32, #tpu.memory_space<vmem>>, vector<64x32xf32>
    %cst = arith.constant dense<0.000000e+00> : vector<8x32xf32>
    %2 = tpu.matmul %0, %1, %cst {dimension_numbers = #tpu.dot_dimension_numbers<[1], [0], [0], [1], [0, 0, 1, 1], [], []>} : vector<8x64xf32>, vector<64x32xf32>, vector<8x32xf32> -> vector<8x32xf32>
    %c0_3 = arith.constant 0 : index
    %c0_4 = arith.constant 0 : index
    %3 = vector.load %arg3[%c0_3, %c0_4] : memref<1x32xf32, #tpu.memory_space<vmem>>, vector<1x32xf32>
    %4 = vector.broadcast %3 : vector<1x32xf32> to vector<8x32xf32>
    %5 = arith.addf %2, %4 : vector<8x32xf32>
    %6 = arith.negf %5 : vector<8x32xf32>
    %7 = math.exp %6 : vector<8x32xf32>
    %cst_5 = arith.constant 1.000000e+00 : f32
    %8 = vector.broadcast %cst_5 : f32 to vector<8x32xf32>
    %9 = arith.addf %8, %7 : vector<8x32xf32>
    %10 = arith.divf %8, %9 : vector<8x32xf32>
    %c0_6 = arith.constant 0 : index
    %c0_7 = arith.constant 0 : index
    %11 = vector.load %arg4[%c0_6, %c0_7] : memref<32x64xf32, #tpu.memory_space<vmem>>, vector<32x64xf32>
    %cst_8 = arith.constant dense<0.000000e+00> : vector<8x64xf32>
    %12 = tpu.matmul %10, %11, %cst_8 {dimension_numbers = #tpu.dot_dimension_numbers<[1], [0], [0], [1], [0, 0, 1, 1], [], []>} : vector<8x32xf32>, vector<32x64xf32>, vector<8x64xf32> -> vector<8x64xf32>
    %c0_9 = arith.constant 0 : index
    %c0_10 = arith.constant 0 : index
    %13 = vector.load %arg5[%c0_9, %c0_10] : memref<1x64xf32, #tpu.memory_space<vmem>>, vector<1x64xf32>
    %14 = vector.broadcast %13 : vector<1x64xf32> to vector<8x64xf32>
    %15 = arith.addf %12, %14 : vector<8x64xf32>
    %c0_11 = arith.constant 0 : index
    %c0_12 = arith.constant 0 : index
    %16 = vector.load %arg6[%c0_11, %c0_12] : memref<8x64xf32, #tpu.memory_space<vmem>>, vector<8x64xf32>
    tpu.vector_store %arg6[%c0_11, %c0_12], %15 {strides = array<i32>} : memref<8x64xf32, #tpu.memory_space<vmem>>, vector<8x64xf32>,
    return
  }
  func.func @transform_0(%arg0: i32) -> (i32, i32) {
    %c0_i32 = arith.constant 0 : i32
    %c0_i32_0 = arith.constant 0 : i32
    return %arg0, %c0_i32 : i32, i32
  }
  func.func @transform_1(%arg0: i32) -> (i32, i32) {
    %c0_i32 = arith.constant 0 : i32
    %c0_i32_0 = arith.constant 0 : i32
    %c0_i32_1 = arith.constant 0 : i32
    return %c0_i32, %c0_i32_0 : i32, i32
  }
  func.func @transform_2(%arg0: i32) -> (i32, i32) {
    %c0_i32 = arith.constant 0 : i32
    %c0_i32_0 = arith.constant 0 : i32
    %c0_i32_1 = arith.constant 0 : i32
    return %c0_i32, %c0_i32_0 : i32, i32
  }
  func.func @transform_3(%arg0: i32) -> (i32, i32) {
    %c0_i32 = arith.constant 0 : i32
    %c0_i32_0 = arith.constant 0 : i32
    %c0_i32_1 = arith.constant 0 : i32
    return %c0_i32, %c0_i32_0 : i32, i32
  }
  func.func @transform_4(%arg0: i32) -> (i32, i32) {
    %c0_i32 = arith.constant 0 : i32
    %c0_i32_0 = arith.constant 0 : i32
    %c0_i32_1 = arith.constant 0 : i32
    return %c0_i32, %c0_i32_0 : i32, i32
  }
  func.func @transform_5(%arg0: i32) -> (i32, i32) {
    %c0_i32 = arith.constant 0 : i32
    %c0_i32_0 = arith.constant 0 : i32
    return %arg0, %c0_i32 : i32, i32
  }
}

</mosaic_0001>

<llo_original>
// kernel: _ae_forward.1
$region0: #{_ae_forward.1}
  #allocation0 [shape = 'u32[]', space=smem, size = 0x4, offset = 0x4, fixed_abs, tag = 'smem constant byte address 0x4 - core index']
  #allocation1 [shape = 'u32[144,128]{1,0:T(1,128)}', space=vmem, size = 0x12000, scoped, tag = 'internal scratch']
  %s0 = inlined_call_operand.vmem [shape: f32[8,64], index: 0, kind: input, shape index: {}]
  %s1 = inlined_call_operand.vmem [shape: f32[64,32], index: 1, kind: input, shape index: {}]
  %s2 = inlined_call_operand.vmem [shape: f32[1,32], index: 2, kind: input, shape index: {}]
  %s3 = inlined_call_operand.vmem [shape: f32[32,64], index: 3, kind: input, shape index: {}]
  %s4 = inlined_call_operand.vmem [shape: f32[1,64], index: 4, kind: input, shape index: {}]
  %s5 = inlined_call_operand.hbm [shape: f32[8,64], index: 5, kind: output, shape index: {}]
  %s6 = sld [smem:[#allocation0]]
  $region30: #{_ae_forward.1} parent=0
    _
  %s8 = ssub.s32 1, %s6
  %s9 = scalar_select 0, %s8, %s6
  $region1: #{_ae_forward.1} parent=0
    #allocation2 [shape = 'u8[4096]{0}', space=vmem, size = 0x1000, scoped, tag = 'output window, operand 0, single buffered']
    #allocation3 [shape = 's32[1]{0}', space=sflag, size = 0x4, scoped, tag = 'scoped memory for _ae_forward.1']
    %10 = vsyncpa [#allocation3], 0
    // Predicated region
    $region2: #{_ae_forward.1} parent=1 // pred_check
      _
    $region3: #{_ae_forward.1} parent=1 // pred_check_branch
      %12 = sbr.rel (0) target = $region5
    $region4: #{_ae_forward.1} parent=1 // pred_region
      _
    $region5: #{_ae_forward.1} parent=1 // pred_fallthru
      _
    // Predicated region
    $region6: #{_ae_forward.1} parent=1 // pred_check
      _
    $region7: #{_ae_forward.1} parent=1 // pred_check_branch
      %14 = sbr.rel (0) target = $region9
    $region8: #{_ae_forward.1} parent=1 // pred_region
      _
    $region9: #{_ae_forward.1} parent=1 // pred_fallthru
      _
    // Predicated region
    $region10: #{_ae_forward.1} parent=1 // pred_check
      _
    $region11: #{_ae_forward.1} parent=1 // pred_check_branch
      %16 = sbr.rel (0) target = $region13
    $region12: #{_ae_forward.1} parent=1 // pred_region
      _
    $region13: #{_ae_forward.1} parent=1 // pred_fallthru
      _
    // Predicated region
    $region14: #{_ae_forward.1} parent=1 // pred_check
      _
    $region15: #{_ae_forward.1} parent=1 // pred_check_branch
      %18 = sbr.rel (0) target = $region17
    $region16: #{_ae_forward.1} parent=1 // pred_region
      _
    $region17: #{_ae_forward.1} parent=1 // pred_fallthru
      _
    // Predicated region
    $region18: #{_ae_forward.1} parent=1 // pred_check
      _
    $region19: #{_ae_forward.1} parent=1 // pred_check_branch
      %20 = sbr.rel (0) target = $region21
    $region20: #{_ae_forward.1} parent=1 // pred_region
      _
    $region21: #{_ae_forward.1} parent=1 // pred_fallthru
      _
    %v21 = vld [vmem:[%s0] sm:$0xff]
    %v22 = vld [vmem:[%s1] sm:$0xff]
    %v23 = vld [vmem:[%s1 + $0x8] sm:$0xff]
    %v24 = vld [vmem:[%s1 + $0x10] sm:$0xff]
    %v25 = vld [vmem:[%s1 + $0x18] sm:$0xff]
    %v26 = vld [vmem:[%s1 + $0x20] sm:$0xff]
    %v27 = vld [vmem:[%s1 + $0x28] sm:$0xff]
    %v28 = vld [vmem:[%s1 + $0x30] sm:$0xff]
    %v29 = vld [vmem:[%s1 + $0x38] sm:$0xff]
    %v30 = vld [vmem:[%s2] sm:$0x1]
    %v32 = vlaneseq
    %v33 = vshrl.u32 %v32, 7
    %v34 = vsub.s32 0, %v33
    %v35 = vrot.slane %v30, %v34
    %vm37 = vcmask 523264
    %v39 = vsel %vm37, %v21, 0
    %41 = vmatprep.subr.mxu0 0.0
    %42 = vmatpush1.msra.mxu0 %v22
    %43 = vmatprep.subr.mxu0 0.0
    %44 = vmatpush1.msra.mxu0 %v23
    %45 = vmatprep.subr.mxu0 0.0
    %46 = vmatpush1.msra.mxu0 %v24
    %47 = vmatprep.subr.mxu0 0.0
    %48 = vmatpush1.msra.mxu0 %v25
    %49 = vmatprep.subr.mxu0 0.0
    %50 = vmatpush1.msra.mxu0 %v26
    %51 = vmatprep.subr.mxu0 0.0
    %52 = vmatpush1.msra.mxu0 %v27
    %53 = vmatprep.subr.mxu0 0.0
    %54 = vmatpush1.msra.mxu0 %v28
    %55 = vmatprep.subr.mxu0 0.0
    %56 = vmatpush1.msra.mxu0 %v29
    %57 = vmatprep.subr.mxu0 0.0
    %58 = vmatpush1.msra.mxu0 0.0
    %59 = vmatprep.subr.mxu0 0.0
    %60 = vmatpush1.msra.mxu0 0.0
    %61 = vmatprep.subr.mxu0 0.0
    %62 = vmatpush1.msra.mxu0 0.0
    %63 = vmatprep.subr.mxu0 0.0
    %64 = vmatpush1.msra.mxu0 0.0
    %65 = vmatprep.subr.mxu0 0.0
    %66 = vmatpush1.msra.mxu0 0.0
    %67 = vmatprep.subr.mxu0 0.0
    %68 = vmatpush1.msra.mxu0 0.0
    %69 = vmatprep.subr.mxu0 0.0
    %70 = vmatpush1.msra.mxu0 0.0
    %71 = vmatprep.subr.mxu0 0.0
    %72 = vmatpush1.msra.mxu0 0.0
    %73 = vmatprep.subr.mxu0 0.0
    %74 = vmatpush1.msra.mxu0 0.0
    %75 = vmatprep.subr.mxu0 0.0
    %76 = vmatpush1.msra.mxu0 0.0
    %77 = vmatprep.subr.mxu0 0.0
    %78 = vmatpush1.msra.mxu0 0.0
    %79 = vmatprep.subr.mxu0 0.0
    %80 = vmatpush1.msra.mxu0 0.0
    %81 = vmatprep.subr.mxu0 0.0
    %82 = vmatpush1.msra.mxu0 0.0
    %83 = vmatprep.subr.mxu0 0.0
    %84 = vmatpush1.msra.mxu0 0.0
    %85 = vmatprep.subr.mxu0 0.0
    %86 = vmatpush1.msra.mxu0 0.0
    %87 = vmatprep.subr.mxu0 0.0
    %88 = vmatpush1.msra.mxu0 0.0
    %89 = vmatprep.subr.mxu0 0.0
    %90 = vmatpush1.msra.mxu0 0.0
    %91 = vmatprep.subr.mxu0 0.0
    %92 = vmatpush1.msra.mxu0 0.0
    %93 = vmatprep.subr.mxu0 0.0
    %94 = vmatpush1.msra.mxu0 0.0
    %95 = vmatprep.subr.mxu0 0.0
    %96 = vmatpush1.msra.mxu0 0.0
    %97 = vmatprep.subr.mxu0 0.0
    %98 = vmatpush1.msra.mxu0 0.0
    %99 = vmatprep.subr.mxu0 0.0
    %100 = vmatpush1.msra.mxu0 0.0
    %101 = vmatprep.subr.mxu0 0.0
    %102 = vmatpush1.msra.mxu0 0.0
    %103 = vmatprep.subr.mxu0 0.0
    %104 = vmatpush1.msra.mxu0 0.0
    %105 = vmatprep.mubr.f32.mxu0 0.0
    %106 = vmatmul.mubr.f32.gmra.mrb[0].mxu0 %v39
    %v107 = vpop.f32.mrb[0].mxu0
    %v108 = vadd.f32 %v35, %v107
    %v109 = vpop.f32.mrb[0].mxu0
    %110 = vdwg.mxu0
    %v111 = vxor.u32 %v108, 2147483648
    %v112 = vmul.f32 %v111, 1.442695
    %v113 = vpow.pop %v112
    %v114 = vadd.f32 %v113, 1.0
    %v115 = vrcp.pop %v114
    %v116 = vmul.f32 1.0, %v115
    %v117 = vld [vmem:[%s3] sm:$0xff]
    %v118 = vld [vmem:[%s3 + $0x8] sm:$0xff]
    %v119 = vld [vmem:[%s3 + $0x10] sm:$0xff]
    %v120 = vld [vmem:[%s3 + $0x18] sm:$0xff]
    %v121 = vld [vmem:[%s4] sm:$0x1]
    %v123 = vlaneseq
    %v124 = vshrl.u32 %v123, 7
    %v125 = vsub.s32 0, %v124
    %v126 = vrot.slane %v121, %v125
    %vm128 = vcmask 261120
    %v130 = vsel %vm128, %v116, 0
    %132 = vmatprep.subr.mxu0 0.0
    %133 = vmatpush1.msra.mxu0 %v117
    %134 = vmatprep.subr.mxu0 0.0
    %135 = vmatpush1.msra.mxu0 %v118
    %136 = vmatprep.subr.mxu0 0.0
    %137 = vmatpush1.msra.mxu0 %v119
    %138 = vmatprep.subr.mxu0 0.0
    %139 = vmatpush1.msra.mxu0 %v120
    %140 = vmatprep.subr.mxu0 0.0
    %141 = vmatpush1.msra.mxu0 0.0
    %142 = vmatprep.subr.mxu0 0.0
    %143 = vmatpush1.msra.mxu0 0.0
    %144 = vmatprep.subr.mxu0 0.0
    %145 = vmatpush1.msra.mxu0 0.0
    %146 = vmatprep.subr.mxu0 0.0
    %147 = vmatpush1.msra.mxu0 0.0
    %148 = vmatprep.subr.mxu0 0.0
    %149 = vmatpush1.msra.mxu0 0.0
    %150 = vmatprep.subr.mxu0 0.0
    %151 = vmatpush1.msra.mxu0 0.0
    %152 = vmatprep.subr.mxu0 0.0
    %153 = vmatpush1.msra.mxu0 0.0
    %154 = vmatprep.subr.mxu0 0.0
    %155 = vmatpush1.msra.mxu0 0.0
    %156 = vmatprep.subr.mxu0 0.0
    %157 = vmatpush1.msra.mxu0 0.0
    %158 = vmatprep.subr.mxu0 0.0
    %159 = vmatpush1.msra.mxu0 0.0
    %160 = vmatprep.subr.mxu0 0.0
    %161 = vmatpush1.msra.mxu0 0.0
    %162 = vmatprep.subr.mxu0 0.0
    %163 = vmatpush1.msra.mxu0 0.0
    %164 = vmatprep.subr.mxu0 0.0
    %165 = vmatpush1.msra.mxu0 0.0
    %166 = vmatprep.subr.mxu0 0.0
    %167 = vmatpush1.msra.mxu0 0.0
    %168 = vmatprep.subr.mxu0 0.0
    %169 = vmatpush1.msra.mxu0 0.0
    %170 = vmatprep.subr.mxu0 0.0
    %171 = vmatpush1.msra.mxu0 0.0
    %172 = vmatprep.subr.mxu0 0.0
    %173 = vmatpush1.msra.mxu0 0.0
    %174 = vmatprep.subr.mxu0 0.0
    %175 = vmatpush1.msra.mxu0 0.0
    %176 = vmatprep.subr.mxu0 0.0
    %177 = vmatpush1.msra.mxu0 0.0
    %178 = vmatprep.subr.mxu0 0.0
    %179 = vmatpush1.msra.mxu0 0.0
    %180 = vmatprep.subr.mxu0 0.0
    %181 = vmatpush1.msra.mxu0 0.0
    %182 = vmatprep.subr.mxu0 0.0
    %183 = vmatpush1.msra.mxu0 0.0
    %184 = vmatprep.subr.mxu0 0.0
    %185 = vmatpush1.msra.mxu0 0.0
    %186 = vmatprep.subr.mxu0 0.0
    %187 = vmatpush1.msra.mxu0 0.0
    %188 = vmatprep.subr.mxu0 0.0
    %189 = vmatpush1.msra.mxu0 0.0
    %190 = vmatprep.subr.mxu0 0.0
    %191 = vmatpush1.msra.mxu0 0.0
    %192 = vmatprep.subr.mxu0 0.0
    %193 = vmatpush1.msra.mxu0 0.0
    %194 = vmatprep.subr.mxu0 0.0
    %195 = vmatpush1.msra.mxu0 0.0
    %196 = vmatprep.mubr.f32.mxu0 0.0
    %197 = vmatmul.mubr.f32.gmra.mrb[0].mxu0 %v130
    %v198 = vpop.f32.mrb[0].mxu0
    %v199 = vadd.f32 %v126, %v198
    %v200 = vpop.f32.mrb[0].mxu0
    %201 = vdwg.mxu0
    %202 = vst.msk [vmem:[#allocation2] sm:$0xff] %vm37, %v199
    // Predicated region
    $region22: #{_ae_forward.1} parent=1 // pred_check
      _
    $region23: #{_ae_forward.1} parent=1 // pred_check_branch
      %204 = sbr.rel (0) target = $region25
    $region24: #{_ae_forward.1} parent=1 // pred_region
      %s206 = ssub.s32 128, 128
      %207 = vsyncadd [#allocation3], %s206
      %s209 = sshll.u32 [#allocation2], 4
      %s210 = int_to_ptr.vmem [resolvable:$true] %s209
      %212 = dma.vmem_to_hbm [thread:$0]  %s210, 128, %s5, [#allocation3]
    $region25: #{_ae_forward.1} parent=1 // pred_fallthru
      _
    // Predicated region
    $region26: #{_ae_forward.1} parent=1 // pred_check
      _
    $region27: #{_ae_forward.1} parent=1 // pred_check_branch
      %214 = sbr.rel (0) target = $region29
    $region28: #{_ae_forward.1} parent=1 // pred_region
      %215 = dma.done [#allocation3], 128
    $region29: #{_ae_forward.1} parent=1 // pred_fallthru
      _
    %216 = vsyncpa [#allocation3], 1

// kernel: _ae_forward.1
$region0: #{_ae_forward.1}
  #allocation0 [shape = 'u32[]', space=smem, size = 0x4, offset = 0x4, fixed_abs, tag = 'smem constant byte address 0x4 - core index']
  #allocation1 [shape = 'u32[144,128]{1,0:T(1,128)}', space=vmem, size = 0x12000, scoped, tag = 'internal scratch']
  %s0 = inlined_call_operand.vmem [shape: f32[8,64], index: 0, kind: input, shape index: {}]
  %s1 = inlined_call_operand.vmem [shape: f32[64,32], index: 1, kind: input, shape index: {}]
  %s2 = inlined_call_operand.vmem [shape: f32[1,32], index: 2, kind: input, shape index: {}]
  %s3 = inlined_call_operand.vmem [shape: f32[32,64], index: 3, kind: input, shape index: {}]
  %s4 = inlined_call_operand.vmem [shape: f32[1,64], index: 4, kind: input, shape index: {}]
  %s5 = inlined_call_operand.hbm [shape: f32[8,64], index: 5, kind: output, shape index: {}]
  %s6 = sld [smem:[#allocation0]]
  $region30: #{_ae_forward.1} parent=0
    _
  %s8 = ssub.s32 1, %s6
  %s9 = scalar_select 0, %s8, %s6
  $region1: #{_ae_forward.1} parent=0
    #allocation2 [shape = 'u8[4096]{0}', space=vmem, size = 0x1000, scoped, tag = 'output window, operand 0, single buffered']
    #allocation3 [shape = 's32[1]{0}', space=sflag, size = 0x4, scoped, tag = 'scoped memory for _ae_forward.1']
    %10 = vsyncpa [#allocation3], 0
    // Predicated region
    $region2: #{_ae_forward.1} parent=1 // pred_check
      _
    $region3: #{_ae_forward.1} parent=1 // pred_check_branch
      %12 = sbr.rel (0) target = $region5
    $region4: #{_ae_forward.1} parent=1 // pred_region
      _
    $region5: #{_ae_forward.1} parent=1 // pred_fallthru
      _
    // Predicated region
    $region6: #{_ae_forward.1} parent=1 // pred_check
      _
    $region7: #{_ae_forward.1} parent=1 // pred_check_branch
      %14 = sbr.rel (0) target = $region9
    $region8: #{_ae_forward.1} parent=1 // pred_region
      _
    $region9: #{_ae_forward.1} parent=1 // pred_fallthru
      _
    // Predicated region
    $region10: #{_ae_forward.1} parent=1 // pred_check
      _
    $region11: #{_ae_forward.1} parent=1 // pred_check_branch
      %16 = sbr.rel (0) target = $region13
    $region12: #{_ae_forward.1} parent=1 // pred_region
      _
    $region13: #{_ae_forward.1} parent=1 // pred_fallthru
      _
    // Predicated region
    $region14: #{_ae_forward.1} parent=1 // pred_check
      _
    $region15: #{_ae_forward.1} parent=1 // pred_check_branch
      %18 = sbr.rel (0) target = $region17
    $region16: #{_ae_forward.1} parent=1 // pred_region
      _
    $region17: #{_ae_forward.1} parent=1 // pred_fallthru
      _
    // Predicated region
    $region18: #{_ae_forward.1} parent=1 // pred_check
      _
    $region19: #{_ae_forward.1} parent=1 // pred_check_branch
      %20 = sbr.rel (0) target = $region21
    $region20: #{_ae_forward.1} parent=1 // pred_region
      _
    $region21: #{_ae_forward.1} parent=1 // pred_fallthru
      _
    %v21 = vld [vmem:[%s0] sm:$0xff]
    %v22 = vld [vmem:[%s1] sm:$0xff]
    %v23 = vld [vmem:[%s1 + $0x8] sm:$0xff]
    %v24 = vld [vmem:[%s1 + $0x10] sm:$0xff]
    %v25 = vld [vmem:[%s1 + $0x18] sm:$0xff]
    %v26 = vld [vmem:[%s1 + $0x20] sm:$0xff]
    %v27 = vld [vmem:[%s1 + $0x28] sm:$0xff]
    %v28 = vld [vmem:[%s1 + $0x30] sm:$0xff]
    %v29 = vld [vmem:[%s1 + $0x38] sm:$0xff]
    %v30 = vld [vmem:[%s2] sm:$0x1]
    %v32 = vlaneseq
    %v33 = vshrl.u32 %v32, 7
    %v34 = vsub.s32 0, %v33
    %v35 = vrot.slane %v30, %v34
    %vm37 = vcmask 523264
    %v39 = vsel %vm37, %v21, 0
    %41 = vmatprep.subr.mxu0 0.0
    %42 = vmatpush1.msra.mxu0 %v22
    %43 = vmatprep.subr.mxu0 0.0
    %44 = vmatpush1.msra.mxu0 %v23
    %45 = vmatprep.subr.mxu0 0.0
    %46 = vmatpush1.msra.mxu0 %v24
    %47 = vmatprep.subr.mxu0 0.0
    %48 = vmatpush1.msra.mxu0 %v25
    %49 = vmatprep.subr.mxu0 0.0
    %50 = vmatpush1.msra.mxu0 %v26
    %51 = vmatprep.subr.mxu0 0.0
    %52 = vmatpush1.msra.mxu0 %v27
    %53 = vmatprep.subr.mxu0 0.0
    %54 = vmatpush1.msra.mxu0 %v28
    %55 = vmatprep.subr.mxu0 0.0
    %56 = vmatpush1.msra.mxu0 %v29
    %57 = vmatprep.subr.mxu0 0.0
    %58 = vmatpush1.msra.mxu0 0.0
    %59 = vmatprep.subr.mxu0 0.0
    %60 = vmatpush1.msra.mxu0 0.0
    %61 = vmatprep.subr.mxu0 0.0
    %62 = vmatpush1.msra.mxu0 0.0
    %63 = vmatprep.subr.mxu0 0.0
    %64 = vmatpush1.msra.mxu0 0.0
    %65 = vmatprep.subr.mxu0 0.0
    %66 = vmatpush1.msra.mxu0 0.0
    %67 = vmatprep.subr.mxu0 0.0
    %68 = vmatpush1.msra.mxu0 0.0
    %69 = vmatprep.subr.mxu0 0.0
    %70 = vmatpush1.msra.mxu0 0.0
    %71 = vmatprep.subr.mxu0 0.0
    %72 = vmatpush1.msra.mxu0 0.0
    %73 = vmatprep.subr.mxu0 0.0
    %74 = vmatpush1.msra.mxu0 0.0
    %75 = vmatprep.subr.mxu0 0.0
    %76 = vmatpush1.msra.mxu0 0.0
    %77 = vmatprep.subr.mxu0 0.0
    %78 = vmatpush1.msra.mxu0 0.0
    %79 = vmatprep.subr.mxu0 0.0
    %80 = vmatpush1.msra.mxu0 0.0
    %81 = vmatprep.subr.mxu0 0.0
    %82 = vmatpush1.msra.mxu0 0.0
    %83 = vmatprep.subr.mxu0 0.0
    %84 = vmatpush1.msra.mxu0 0.0
    %85 = vmatprep.subr.mxu0 0.0
    %86 = vmatpush1.msra.mxu0 0.0
    %87 = vmatprep.subr.mxu0 0.0
    %88 = vmatpush1.msra.mxu0 0.0
    %89 = vmatprep.subr.mxu0 0.0
    %90 = vmatpush1.msra.mxu0 0.0
    %91 = vmatprep.subr.mxu0 0.0
    %92 = vmatpush1.msra.mxu0 0.0
    %93 = vmatprep.subr.mxu0 0.0
    %94 = vmatpush1.msra.mxu0 0.0
    %95 = vmatprep.subr.mxu0 0.0
    %96 = vmatpush1.msra.mxu0 0.0
    %97 = vmatprep.subr.mxu0 0.0
    %98 = vmatpush1.msra.mxu0 0.0
    %99 = vmatprep.subr.mxu0 0.0
    %100 = vmatpush1.msra.mxu0 0.0
    %101 = vmatprep.subr.mxu0 0.0
    %102 = vmatpush1.msra.mxu0 0.0
    %103 = vmatprep.subr.mxu0 0.0
    %104 = vmatpush1.msra.mxu0 0.0
    %105 = vmatprep.mubr.f32.mxu0 0.0
    %106 = vmatmul.mubr.f32.gmra.mrb[0].mxu0 %v39
    %v107 = vpop.f32.mrb[0].mxu0
    %v108 = vadd.f32 %v35, %v107
    %v109 = vpop.f32.mrb[0].mxu0
    %110 = vdwg.mxu0
    %v111 = vxor.u32 %v108, 2147483648
    %v112 = vmul.f32 %v111, 1.442695
    %v113 = vpow.pop %v112
    %v114 = vadd.f32 %v113, 1.0
    %v115 = vrcp.pop %v114
    %v116 = vmul.f32 1.0, %v115
    %v117 = vld [vmem:[%s3] sm:$0xff]
    %v118 = vld [vmem:[%s3 + $0x8] sm:$0xff]
    %v119 = vld [vmem:[%s3 + $0x10] sm:$0xff]
    %v120 = vld [vmem:[%s3 + $0x18] sm:$0xff]
    %v121 = vld [vmem:[%s4] sm:$0x1]
    %v123 = vlaneseq
    %v124 = vshrl.u32 %v123, 7
    %v125 = vsub.s32 0, %v124
    %v126 = vrot.slane %v121, %v125
    %vm128 = vcmask 261120
    %v130 = vsel %vm128, %v116, 0
    %132 = vmatprep.subr.mxu0 0.0
    %133 = vmatpush1.msra.mxu0 %v117
    %134 = vmatprep.subr.mxu0 0.0
    %135 = vmatpush1.msra.mxu0 %v118
    %136 = vmatprep.subr.mxu0 0.0
    %137 = vmatpush1.msra.mxu0 %v119
    %138 = vmatprep.subr.mxu0 0.0
    %139 = vmatpush1.msra.mxu0 %v120
    %140 = vmatprep.subr.mxu0 0.0
    %141 = vmatpush1.msra.mxu0 0.0
    %142 = vmatprep.subr.mxu0 0.0
    %143 = vmatpush1.msra.mxu0 0.0
    %144 = vmatprep.subr.mxu0 0.0
    %145 = vmatpush1.msra.mxu0 0.0
    %146 = vmatprep.subr.mxu0 0.0
    %147 = vmatpush1.msra.mxu0 0.0
    %148 = vmatprep.subr.mxu0 0.0
    %149 = vmatpush1.msra.mxu0 0.0
    %150 = vmatprep.subr.mxu0 0.0
    %151 = vmatpush1.msra.mxu0 0.0
    %152 = vmatprep.subr.mxu0 0.0
    %153 = vmatpush1.msra.mxu0 0.0
    %154 = vmatprep.subr.mxu0 0.0
    %155 = vmatpush1.msra.mxu0 0.0
    %156 = vmatprep.subr.mxu0 0.0
    %157 = vmatpush1.msra.mxu0 0.0
    %158 = vmatprep.subr.mxu0 0.0
    %159 = vmatpush1.msra.mxu0 0.0
    %160 = vmatprep.subr.mxu0 0.0
    %161 = vmatpush1.msra.mxu0 0.0
    %162 = vmatprep.subr.mxu0 0.0
    %163 = vmatpush1.msra.mxu0 0.0
    %164 = vmatprep.subr.mxu0 0.0
    %165 = vmatpush1.msra.mxu0 0.0
    %166 = vmatprep.subr.mxu0 0.0
    %167 = vmatpush1.msra.mxu0 0.0
    %168 = vmatprep.subr.mxu0 0.0
    %169 = vmatpush1.msra.mxu0 0.0
    %170 = vmatprep.subr.mxu0 0.0
    %171 = vmatpush1.msra.mxu0 0.0
    %172 = vmatprep.subr.mxu0 0.0
    %173 = vmatpush1.msra.mxu0 0.0
    %174 = vmatprep.subr.mxu0 0.0
    %175 = vmatpush1.msra.mxu0 0.0
    %176 = vmatprep.subr.mxu0 0.0
    %177 = vmatpush1.msra.mxu0 0.0
    %178 = vmatprep.subr.mxu0 0.0
    %179 = vmatpush1.msra.mxu0 0.0
    %180 = vmatprep.subr.mxu0 0.0
    %181 = vmatpush1.msra.mxu0 0.0
    %182 = vmatprep.subr.mxu0 0.0
    %183 = vmatpush1.msra.mxu0 0.0
    %184 = vmatprep.subr.mxu0 0.0
    %185 = vmatpush1.msra.mxu0 0.0
    %186 = vmatprep.subr.mxu0 0.0
    %187 = vmatpush1.msra.mxu0 0.0
    %188 = vmatprep.subr.mxu0 0.0
    %189 = vmatpush1.msra.mxu0 0.0
    %190 = vmatprep.subr.mxu0 0.0
    %191 = vmatpush1.msra.mxu0 0.0
    %192 = vmatprep.subr.mxu0 0.0
    %193 = vmatpush1.msra.mxu0 0.0
    %194 = vmatprep.subr.mxu0 0.0
    %195 = vmatpush1.msra.mxu0 0.0
    %196 = vmatprep.mubr.f32.mxu0 0.0
    %197 = vmatmul.mubr.f32.gmra.mrb[0].mxu0 %v130
    %v198 = vpop.f32.mrb[0].mxu0
    %v199 = vadd.f32 %v126, %v198
    %v200 = vpop.f32.mrb[0].mxu0
    %201 = vdwg.mxu0
    %202 = vst.msk [vmem:[#allocation2] sm:$0xff] %vm37, %v199
    // Predicated region
    $region22: #{_ae_forward.1} parent=1 // pred_check
      _
    $region23: #{_ae_forward.1} parent=1 // pred_check_branch
      %204 = sbr.rel (0) target = $region25
    $region24: #{_ae_forward.1} parent=1 // pred_region
      %s206 = ssub.s32 128, 128
      %207 = vsyncadd [#allocation3], %s206
      %s209 = sshll.u32 [#allocation2], 4
      %s210 = int_to_ptr.vmem [resolvable:$true] %s209
      %212 = dma.vmem_to_hbm [thread:$0]  %s210, 128, %s5, [#allocation3]
    $region25: #{_ae_forward.1} parent=1 // pred_fallthru
      _
    // Predicated region
    $region26: #{_ae_forward.1} parent=1 // pred_check
      _
    $region27: #{_ae_forward.1} parent=1 // pred_check_branch
      %214 = sbr.rel (0) target = $region29
    $region28: #{_ae_forward.1} parent=1 // pred_region
      %215 = dma.done [#allocation3], 128
    $region29: #{_ae_forward.1} parent=1 // pred_fallthru
      _
    %216 = vsyncpa [#allocation3], 1

</llo_original>
